<compile_context>
chip_gen: v7x
topology: tpu7x:2x2x1
jax: 0.10.0
libtpu: 0.0.40
codegen_flags: <defaults>
</compile_context>

<pallas_src>
import functools

import jax
import jax.numpy as jnp
from jax.experimental import pallas as pl
from jax.experimental.pallas import tpu as pltpu


def _patch_matmul_kernel(x_ref, w_ref, b_ref, o_ref):
    """One (batch-block, L_out-tile) grid step.

    x_ref : (Bt, K, tL)   bf16   repacked activations, lanes = L_out (dense)
    w_ref : (C_out, K)    bf16   resident flattened conv weight
    b_ref : (C_out, 1)    f32    resident bias
    o_ref : (Bt, C_out, tL)      output, lanes = L_out (dense, final layout)
    """
    w = w_ref[...]
    b = b_ref[...]
    bt = x_ref.shape[0]
    for i in range(bt):                       # static unroll, Bt is small
        acc = jnp.dot(w, x_ref[i], preferred_element_type=jnp.float32)
        o_ref[i] = (acc + b).astype(o_ref.dtype)


def patch_emerging_forward(x, weight, bias, *, patch_size, stride,
                           compute_dtype=jnp.bfloat16, out_dtype=None,
                           tile_l=512, max_batch_block=8):
    """Equivalent of nn.Conv1d(C_in, C_out, patch_size, stride)(x).

    x:      (B, C_in, L)
    weight: (C_out, C_in, patch_size)
    bias:   (C_out,)
    returns (B, C_out, L_out),  L_out = (L - patch_size) // stride + 1
    """
    B, C_in, L = x.shape
    C_out = weight.shape[0]
    P = patch_size
    L_out = (L - P) // stride + 1
    K = C_in * P
    out_dtype = x.dtype if out_dtype is None else out_dtype

    # ---- repack x -> (B, C_in*P, L_out): contraction on sublanes, L_out on lanes.
    # One fused XLA transpose+convert pass; replaces im2col / selection matmul.
    if stride == P:
        xw = x[:, :, : L_out * P].reshape(B, C_in, L_out, P)
    else:
        # TODO(synk): overlapping windows (stride != patch_size) fall back to an
        # XLA gather here; correct but materializes (B, C_in, L_out, P) in HBM.
        idx = jnp.arange(L_out)[:, None] * stride + jnp.arange(P)[None, :]
        xw = x[:, :, idx]                                        # (B, C_in, L_out, P)
    xk = jnp.transpose(xw, (0, 1, 3, 2)).reshape(B, K, L_out).astype(compute_dtype)

    # ---- L_out tiling: full extent when small, 128-aligned big tiles otherwise.
    if L_out <= tile_l:
        tL, n_lt, L_pad = L_out, 1, L_out
    else:
        tL = tile_l                                              # multiple of 128
        n_lt = -(-L_out // tL)
        L_pad = n_lt * tL
        if L_pad != L_out:
            xk = jnp.pad(xk, ((0, 0), (0, 0), (0, L_pad - L_out)))

    # ---- batch blocking: largest divisor of B that is <= max_batch_block and
    # keeps the per-step (x block + out block) comfortably inside scoped VMEM.
    row_bytes = (K * tL * jnp.dtype(compute_dtype).itemsize
                 + C_out * tL * jnp.dtype(out_dtype).itemsize)
    budget = 4 << 20                                             # ~4 MiB/step (x2 buffers)
    Bt = 1
    for cand in range(min(B, max_batch_block), 0, -1):
        if B % cand == 0 and (cand == 1 or cand * row_bytes <= budget):
            Bt = cand
            break
    n_bt = B // Bt

    # ---- tiny resident operands (weight flattened so k = c*P + p matches xk rows).
    wk = weight.reshape(C_out, K).astype(compute_dtype)          # (C_out, K)
    b2 = bias.reshape(C_out, 1).astype(jnp.float32)              # (C_out, 1)

    kernel = pl.pallas_call(
        _patch_matmul_kernel,
        out_shape=jax.ShapeDtypeStruct((B, C_out, L_pad), out_dtype),
        grid_spec=pltpu.PrefetchScalarGridSpec(
            num_scalar_prefetch=0,
            grid=(n_bt, n_lt),
            in_specs=[
                pl.BlockSpec((Bt, K, tL), lambda b, j: (b, 0, j)),
                pl.BlockSpec((C_out, K), lambda b, j: (0, 0)),
                pl.BlockSpec((C_out, 1), lambda b, j: (0, 0)),
            ],
            out_specs=pl.BlockSpec((Bt, C_out, tL), lambda b, j: (b, 0, j)),
        ),
        compiler_params=pltpu.CompilerParams(
            dimension_semantics=("parallel", "parallel")),
    )

    out = kernel(xk, wk, b2)                                     # (B, C_out, L_pad)
    if L_pad != L_out:
        out = out[:, :, :L_out]
    return out


def _reference_conv1d(x, weight, bias, *, stride):
    # lax conv for correctness check (NCL / OIW layout), f32 accumulation.
    y = jax.lax.conv_general_dilated(
        x, weight,
        window_strides=(stride,),
        padding="VALID",
        dimension_numbers=("NCH", "OIH", "NCH"),
    )
    return y + bias[None, :, None]


if __name__ == "__main__":
    key = jax.random.PRNGKey(0)
    kx, kw, kb = jax.random.split(key, 3)

    # PatchEmerging(in_channels=4, out_channels=32, patch_size=4, stride=4)
    B, C_in, L = 2, 4, 16
    C_out, patch_size, stride = 32, 4, 4

    x = jax.random.normal(kx, (B, C_in, L), dtype=jnp.float32)
    bound = 1.0 / (C_in * patch_size) ** 0.5
    weight = jax.random.uniform(kw, (C_out, C_in, patch_size),
                                jnp.float32, -bound, bound)
    bias = jax.random.uniform(kb, (C_out,), jnp.float32, -bound, bound)

    fwd = jax.jit(functools.partial(patch_emerging_forward,
                                    patch_size=patch_size, stride=stride))
    out = fwd(x, weight, bias)
    jax.block_until_ready(out)

    # Reference: f32 conv on the bf16-rounded operands (the kernel uses bf16
    # inputs with f32 accumulation), so only accumulation-order noise remains.
    xr = x.astype(jnp.bfloat16).astype(jnp.float32)
    wr = weight.astype(jnp.bfloat16).astype(jnp.float32)
    ref = _reference_conv1d(xr, wr, bias, stride=stride)

    assert out.shape == (B, C_out, (L - patch_size) // stride + 1), out.shape
    assert jnp.allclose(out, ref, atol=2e-3, rtol=2e-3), "mismatch vs reference"

    print("KERNEL_OK")
</pallas_src>

<mosaic_0001>
module attributes {stable_mosaic.version = 11 : i64} {
  func.func @_patch_matmul_kernel(%arg0: i32, %arg1: i32, %arg2: memref<2x16x4xbf16, #tpu.memory_space<vmem>>, %arg3: memref<32x16xbf16, #tpu.memory_space<vmem>>, %arg4: memref<32x1xf32, #tpu.memory_space<vmem>>, %arg5: memref<2x32x4xf32, #tpu.memory_space<vmem>>) attributes {dimension_semantics = [#tpu.dimension_semantics<parallel>, #tpu.dimension_semantics<parallel>], iteration_bounds = array<i64: 1, 1>, scalar_prefetch = 0 : i64, scratch_operands = 0 : i64, tpu.core_type = #tpu.core_type<tc>, window_params = [{transform_indices = @transform_0, window_bounds = array<i64: 2, 16, 4>}, {pipeline_mode = #tpu.pipeline_mode<synchronous>, transform_indices = @transform_1, window_bounds = array<i64: 32, 16>}, {pipeline_mode = #tpu.pipeline_mode<synchronous>, transform_indices = @transform_2, window_bounds = array<i64: 32, 1>}, {transform_indices = @transform_3, window_bounds = array<i64: 2, 32, 4>}]} {
    %c0 = arith.constant 0 : index
    %c0_0 = arith.constant 0 : index
    %0 = vector.load %arg3[%c0, %c0_0] : memref<32x16xbf16, #tpu.memory_space<vmem>>, vector<32x16xbf16>
    %c0_1 = arith.constant 0 : index
    %c0_2 = arith.constant 0 : index
    %1 = vector.load %arg4[%c0_1, %c0_2] : memref<32x1xf32, #tpu.memory_space<vmem>>, vector<32x1xf32>
    %c0_3 = arith.constant 0 : index
    %c0_4 = arith.constant 0 : index
    %c0_5 = arith.constant 0 : index
    %2 = vector.load %arg2[%c0_3, %c0_4, %c0_5] : memref<2x16x4xbf16, #tpu.memory_space<vmem>>, vector<1x16x4xbf16>
    %3 = vector.shape_cast %2 : vector<1x16x4xbf16> to vector<16x4xbf16>
    %cst = arith.constant dense<0.000000e+00> : vector<32x4xf32>
    %4 = tpu.matmul %0, %3, %cst {dimension_numbers = #tpu.dot_dimension_numbers<[1], [0], [0], [1], [0, 0, 1, 1], [], []>} : vector<32x16xbf16>, vector<16x4xbf16>, vector<32x4xf32> -> vector<32x4xf32>
    %5 = vector.broadcast %1 : vector<32x1xf32> to vector<32x4xf32>
    %6 = arith.addf %4, %5 : vector<32x4xf32>
    %c0_6 = arith.constant 0 : index
    %c0_7 = arith.constant 0 : index
    %c0_8 = arith.constant 0 : index
    %7 = vector.load %arg5[%c0_6, %c0_7, %c0_8] : memref<2x32x4xf32, #tpu.memory_space<vmem>>, vector<1x32x4xf32>
    %8 = vector.shape_cast %7 : vector<1x32x4xf32> to vector<32x4xf32>
    %9 = vector.shape_cast %6 : vector<32x4xf32> to vector<1x32x4xf32>
    tpu.vector_store %arg5[%c0_6, %c0_7, %c0_8], %9 {strides = array<i32>} : memref<2x32x4xf32, #tpu.memory_space<vmem>>, vector<1x32x4xf32>,
    %c1 = arith.constant 1 : index
    %c0_9 = arith.constant 0 : index
    %c0_10 = arith.constant 0 : index
    %10 = vector.load %arg2[%c1, %c0_9, %c0_10] : memref<2x16x4xbf16, #tpu.memory_space<vmem>>, vector<1x16x4xbf16>
    %11 = vector.shape_cast %10 : vector<1x16x4xbf16> to vector<16x4xbf16>
    %cst_11 = arith.constant dense<0.000000e+00> : vector<32x4xf32>
    %12 = tpu.matmul %0, %11, %cst_11 {dimension_numbers = #tpu.dot_dimension_numbers<[1], [0], [0], [1], [0, 0, 1, 1], [], []>} : vector<32x16xbf16>, vector<16x4xbf16>, vector<32x4xf32> -> vector<32x4xf32>
    %13 = vector.broadcast %1 : vector<32x1xf32> to vector<32x4xf32>
    %14 = arith.addf %12, %13 : vector<32x4xf32>
    %c1_12 = arith.constant 1 : index
    %c0_13 = arith.constant 0 : index
    %c0_14 = arith.constant 0 : index
    %15 = vector.load %arg5[%c1_12, %c0_13, %c0_14] : memref<2x32x4xf32, #tpu.memory_space<vmem>>, vector<1x32x4xf32>
    %16 = vector.shape_cast %15 : vector<1x32x4xf32> to vector<32x4xf32>
    %17 = vector.shape_cast %14 : vector<32x4xf32> to vector<1x32x4xf32>
    tpu.vector_store %arg5[%c1_12, %c0_13, %c0_14], %17 {strides = array<i32>} : memref<2x32x4xf32, #tpu.memory_space<vmem>>, vector<1x32x4xf32>,
    return
  }
  func.func @transform_0(%arg0: i32, %arg1: i32) -> (i32, i32, i32) {
    %c0_i32 = arith.constant 0 : i32
    %c0_i32_0 = arith.constant 0 : i32
    return %arg0, %c0_i32, %arg1 : i32, i32, i32
  }
  func.func @transform_1(%arg0: i32, %arg1: i32) -> (i32, i32) {
    %c0_i32 = arith.constant 0 : i32
    %c0_i32_0 = arith.constant 0 : i32
    %c0_i32_1 = arith.constant 0 : i32
    return %c0_i32, %c0_i32_0 : i32, i32
  }
  func.func @transform_2(%arg0: i32, %arg1: i32) -> (i32, i32) {
    %c0_i32 = arith.constant 0 : i32
    %c0_i32_0 = arith.constant 0 : i32
    %c0_i32_1 = arith.constant 0 : i32
    return %c0_i32, %c0_i32_0 : i32, i32
  }
  func.func @transform_3(%arg0: i32, %arg1: i32) -> (i32, i32, i32) {
    %c0_i32 = arith.constant 0 : i32
    %c0_i32_0 = arith.constant 0 : i32
    return %arg0, %c0_i32, %arg1 : i32, i32, i32
  }
}

</mosaic_0001>

<llo_original>
// kernel: patch_emerging_forward.1
$region0: #{patch_emerging_forward.1}
  #allocation0 [shape = 'u32[]', space=smem, size = 0x4, offset = 0x4, fixed_abs, tag = 'smem constant byte address 0x4 - core index']
  #allocation1 [shape = 'u32[144,128]{1,0:T(1,128)}', space=vmem, size = 0x12000, scoped, tag = 'internal scratch']
  %s0 = inlined_call_operand.vmem [shape: bf16[2,16,4], index: 0, kind: input, shape index: {}]
  %s1 = inlined_call_operand.vmem [shape: bf16[32,16], index: 1, kind: input, shape index: {}]
  %s2 = inlined_call_operand.vmem [shape: f32[32,1], index: 2, kind: input, shape index: {}]
  %s3 = inlined_call_operand.vmem [shape: f32[2,32,4], index: 3, kind: output, shape index: {}]
  %s4 = sld [smem:[#allocation0]]
  $region22: #{patch_emerging_forward.1} parent=0
    _
  %s6 = ssub.s32 1, %s4
  %s7 = scalar_select 0, %s6, %s4
  // Predicated region
  $region2: #{patch_emerging_forward.1} parent=0 // pred_check
    _
  $region3: #{patch_emerging_forward.1} parent=0 // pred_check_branch
    %9 = sbr.rel (0) target = $region5
  $region4: #{patch_emerging_forward.1} parent=0 // pred_region
    _
  $region5: #{patch_emerging_forward.1} parent=0 // pred_fallthru
    _
  // Predicated region
  $region6: #{patch_emerging_forward.1} parent=0 // pred_check
    _
  $region7: #{patch_emerging_forward.1} parent=0 // pred_check_branch
    %11 = sbr.rel (0) target = $region9
  $region8: #{patch_emerging_forward.1} parent=0 // pred_region
    _
  $region9: #{patch_emerging_forward.1} parent=0 // pred_fallthru
    _
  // Predicated region
  $region10: #{patch_emerging_forward.1} parent=0 // pred_check
    _
  $region11: #{patch_emerging_forward.1} parent=0 // pred_check_branch
    %13 = sbr.rel (0) target = $region13
  $region12: #{patch_emerging_forward.1} parent=0 // pred_region
    _
  $region13: #{patch_emerging_forward.1} parent=0 // pred_fallthru
    _
  %v15 = vld [vmem:[%s1] sm:$0xf]
  %v16 = vld [vmem:[%s1 + $0x4] sm:$0xf]
  %v17 = vld [vmem:[%s1 + $0x8] sm:$0xf]
  %v18 = vld [vmem:[%s1 + $0xc] sm:$0xf]
  %v19 = vld [vmem:[%s2] sm:$0xff]
  %v20 = vld [vmem:[%s2 + $0x8] sm:$0xff]
  %v21 = vld [vmem:[%s2 + $0x10] sm:$0xff]
  %v22 = vld [vmem:[%s2 + $0x18] sm:$0xff]
  %v23 = vld [vmem:[%s0] sm:$0xf]
  %v24 = vld [vmem:[%s0 + $0x4] sm:$0xf]
  %26 = vset.pattern.permute.xlu0 0
  %27 = vperm.xlu0 %26, %v19
  %v28 = vpop.permute.xlu0 %27
  %31 = vset.pattern.permute.xlu0 0
  %32 = vperm.xlu0 %31, %v20
  %v33 = vpop.permute.xlu0 %32
  %36 = vset.pattern.permute.xlu0 0
  %37 = vperm.xlu0 %36, %v21
  %v38 = vpop.permute.xlu0 %37
  %41 = vset.pattern.permute.xlu0 0
  %42 = vperm.xlu0 %41, %v22
  %v43 = vpop.permute.xlu0 %42
  %v49 = vunpack.c.l.b16 %v15
  %v50 = vunpack.c.l.b16 %v16
  %v51 = vunpack.c.l.b16 %v17
  %v52 = vunpack.c.l.b16 %v18
  %v53 = vpack.c.b16 %v50, %v49
  %v54 = vpack.c.b16 %v52, %v51
  %v57 = vunpack.c.l.b16 %v23
  %v58 = vunpack.c.l.b16 %v24
  %v59 = vpack.c.b16 %v58, %v57
  %vm61 = vcmask 130048
  %v63 = vsel %vm61, %v53, 0
  %v66 = vsel %vm61, %v54, 0
  %68 = vmatprep.subr.bf16.mxu0 0
  %69 = vmatpush1.bf16.msra.mxu0 %v59
  %70 = vmatprep.subr.bf16.mxu0 0
  %71 = vmatpush1.bf16.msra.mxu0 0
  %72 = vmatprep.subr.bf16.mxu0 0
  %73 = vmatpush1.bf16.msra.mxu0 0
  %74 = vmatprep.subr.bf16.mxu0 0
  %75 = vmatpush1.bf16.msra.mxu0 0
  %76 = vmatprep.subr.bf16.mxu0 0
  %77 = vmatpush1.bf16.msra.mxu0 0
  %78 = vmatprep.subr.bf16.mxu0 0
  %79 = vmatpush1.bf16.msra.mxu0 0
  %80 = vmatprep.subr.bf16.mxu0 0
  %81 = vmatpush1.bf16.msra.mxu0 0
  %82 = vmatprep.subr.bf16.mxu0 0
  %83 = vmatpush1.bf16.msra.mxu0 0
  %84 = vmatprep.subr.bf16.mxu0 0
  %85 = vmatpush1.bf16.msra.mxu0 0
  %86 = vmatprep.subr.bf16.mxu0 0
  %87 = vmatpush1.bf16.msra.mxu0 0
  %88 = vmatprep.subr.bf16.mxu0 0
  %89 = vmatpush1.bf16.msra.mxu0 0
  %90 = vmatprep.subr.bf16.mxu0 0
  %91 = vmatpush1.bf16.msra.mxu0 0
  %92 = vmatprep.subr.bf16.mxu0 0
  %93 = vmatpush1.bf16.msra.mxu0 0
  %94 = vmatprep.subr.bf16.mxu0 0
  %95 = vmatpush1.bf16.msra.mxu0 0
  %96 = vmatprep.subr.bf16.mxu0 0
  %97 = vmatpush1.bf16.msra.mxu0 0
  %98 = vmatprep.subr.bf16.mxu0 0
  %99 = vmatpush1.bf16.msra.mxu0 0
  %100 = vmatprep.mubr.bf16.mxu0 0
  %101 = vmatmul.mubr.bf16.gmra.mrb[0].mxu0 %v63
  %v102 = vpop.f32.mrb[0].mxu0
  %v103 = vadd.f32 %v28, %v102
  %v104 = vpop.f32.mrb[0].mxu0
  %v105 = vpop.f32.mrb[0].mxu0
  %v106 = vadd.f32 %v33, %v105
  %v107 = vpop.f32.mrb[0].mxu0
  %108 = vmatprep.mubr.bf16.mxu0 0
  %109 = vmatmul.mubr.bf16.gmra.mrb[0].mxu0 %v66
  %v110 = vpop.f32.mrb[0].mxu0
  %v111 = vadd.f32 %v38, %v110
  %v112 = vpop.f32.mrb[0].mxu0
  %v113 = vpop.f32.mrb[0].mxu0
  %v114 = vadd.f32 %v43, %v113
  %v115 = vpop.f32.mrb[0].mxu0
  %116 = vdwg.mxu0
  %vm117 = vcmask 31744
  %118 = vst.msk [vmem:[%s3] sm:$0xff] %vm117, %v103
  %119 = vst.msk [vmem:[%s3 + $0x8] sm:$0xff] %vm117, %v106
  %120 = vst.msk [vmem:[%s3 + $0x10] sm:$0xff] %vm117, %v111
  %121 = vst.msk [vmem:[%s3 + $0x18] sm:$0xff] %vm117, %v114
  %s122 = scalar_lea.vmem %s0, 8
  %v123 = vld [vmem:[%s122] sm:$0xf]
  %v124 = vld [vmem:[%s122 + $0x4] sm:$0xf]
  %v127 = vunpack.c.l.b16 %v123
  %v128 = vunpack.c.l.b16 %v124
  %v129 = vpack.c.b16 %v128, %v127
  %131 = vmatprep.subr.bf16.mxu0 0
  %132 = vmatpush1.bf16.msra.mxu0 %v129
  %133 = vmatprep.subr.bf16.mxu0 0
  %134 = vmatpush1.bf16.msra.mxu0 0
  %135 = vmatprep.subr.bf16.mxu0 0
  %136 = vmatpush1.bf16.msra.mxu0 0
  %137 = vmatprep.subr.bf16.mxu0 0
  %138 = vmatpush1.bf16.msra.mxu0 0
  %139 = vmatprep.subr.bf16.mxu0 0
  %140 = vmatpush1.bf16.msra.mxu0 0
  %141 = vmatprep.subr.bf16.mxu0 0
  %142 = vmatpush1.bf16.msra.mxu0 0
  %143 = vmatprep.subr.bf16.mxu0 0
  %144 = vmatpush1.bf16.msra.mxu0 0
  %145 = vmatprep.subr.bf16.mxu0 0
  %146 = vmatpush1.bf16.msra.mxu0 0
  %147 = vmatprep.subr.bf16.mxu0 0
  %148 = vmatpush1.bf16.msra.mxu0 0
  %149 = vmatprep.subr.bf16.mxu0 0
  %150 = vmatpush1.bf16.msra.mxu0 0
  %151 = vmatprep.subr.bf16.mxu0 0
  %152 = vmatpush1.bf16.msra.mxu0 0
  %153 = vmatprep.subr.bf16.mxu0 0
  %154 = vmatpush1.bf16.msra.mxu0 0
  %155 = vmatprep.subr.bf16.mxu0 0
  %156 = vmatpush1.bf16.msra.mxu0 0
  %157 = vmatprep.subr.bf16.mxu0 0
  %158 = vmatpush1.bf16.msra.mxu0 0
  %159 = vmatprep.subr.bf16.mxu0 0
  %160 = vmatpush1.bf16.msra.mxu0 0
  %161 = vmatprep.subr.bf16.mxu0 0
  %162 = vmatpush1.bf16.msra.mxu0 0
  %163 = vmatprep.mubr.bf16.mxu0 0
  %164 = vmatmul.mubr.bf16.gmra.mrb[0].mxu0 %v63
  %v165 = vpop.f32.mrb[0].mxu0
  %v166 = vadd.f32 %v28, %v165
  %v167 = vpop.f32.mrb[0].mxu0
  %v168 = vpop.f32.mrb[0].mxu0
  %v169 = vadd.f32 %v33, %v168
  %v170 = vpop.f32.mrb[0].mxu0
  %171 = vmatprep.mubr.bf16.mxu0 0
  %172 = vmatmul.mubr.bf16.gmra.mrb[0].mxu0 %v66
  %v173 = vpop.f32.mrb[0].mxu0
  %v174 = vadd.f32 %v38, %v173
  %v175 = vpop.f32.mrb[0].mxu0
  %v176 = vpop.f32.mrb[0].mxu0
  %v177 = vadd.f32 %v43, %v176
  %v178 = vpop.f32.mrb[0].mxu0
  %179 = vdwg.mxu0
  %s180 = scalar_lea.vmem %s3, 32
  %181 = vst.msk [vmem:[%s180] sm:$0xff] %vm117, %v166
  %182 = vst.msk [vmem:[%s180 + $0x8] sm:$0xff] %vm117, %v169
  %183 = vst.msk [vmem:[%s180 + $0x10] sm:$0xff] %vm117, %v174
  %184 = vst.msk [vmem:[%s180 + $0x18] sm:$0xff] %vm117, %v177
  // Predicated region
  $region14: #{patch_emerging_forward.1} parent=0 // pred_check
    _
  $region15: #{patch_emerging_forward.1} parent=0 // pred_check_branch
    %186 = sbr.rel (0) target = $region17
  $region16: #{patch_emerging_forward.1} parent=0 // pred_region
    _
  $region17: #{patch_emerging_forward.1} parent=0 // pred_fallthru
    _
  // Predicated region
  $region18: #{patch_emerging_forward.1} parent=0 // pred_check
    _
  $region19: #{patch_emerging_forward.1} parent=0 // pred_check_branch
    %188 = sbr.rel (0) target = $region21
  $region20: #{patch_emerging_forward.1} parent=0 // pred_region
    _
  $region21: #{patch_emerging_forward.1} parent=0 // pred_fallthru
    _

</llo_original>
